<compile_context>
chip_gen: v7x
topology: tpu7x:2x2x1
jax: 0.10.0
libtpu: 0.0.40
codegen_flags: <defaults>
</compile_context>

<pallas_src>
import functools

import jax
import jax.numpy as jnp
from jax import lax
from jax.experimental import pallas as pl
from jax.experimental.pallas import tpu as pltpu

_LANES = 128
_SUBLANES = 8
_CHUNK_ROWS = 256                      # single-pass chunk: temps <= 128 KiB
_MAX_BLOCK_ROWS = 4096                 # 2 MiB/input f32 tile; 2 in x 2 buf = 8 MiB
_VMEM_LIMIT_BYTES = 32 * 1024 * 1024   # headroom; under v7x 64 MiB physical VMEM


def _round_up(x, m):
    return (x + m - 1) // m * m


def _num_tensorcores():
    """Return 2 only on chips with >1 TensorCore per device (v4/v5p, v7x)."""
    try:
        kind = jax.devices()[0].device_kind.lower().replace(" ", "")
    except Exception:
        return 1
    if "lite" in kind or "v5e" in kind or "v6" in kind:
        return 1          # v5e / v6e: single TensorCore
    if "v4" in kind or "v5p" in kind or "v5" in kind or "v7" in kind or "7x" in kind:
        return 2          # v4 / v5p megacore, v7x dual TensorCore
    return 1


def _choose_tiling(rows, ncores, granule):
    """Pick (block_rows, chunk_rows, total_blocks, steps_per_core)."""
    block_rows = min(_MAX_BLOCK_ROWS, _round_up(rows, granule))
    total_blocks = pl.cdiv(rows, block_rows)
    if ncores > 1 and total_blocks % ncores:
        # Balance the TensorCores: shrink the block so the block count splits
        # evenly instead of letting one core run an extra trailing step.
        target = _round_up(total_blocks, ncores)
        block_rows = min(block_rows, _round_up(pl.cdiv(rows, target), granule))
        total_blocks = pl.cdiv(rows, block_rows)
    if block_rows > _CHUNK_ROWS:
        # Keep the block a multiple of the in-kernel chunk so the fori_loop
        # trip count is static and exact.
        block_rows = _round_up(block_rows, _CHUNK_ROWS)
        total_blocks = pl.cdiv(rows, block_rows)
        chunk_rows = _CHUNK_ROWS
    else:
        chunk_rows = block_rows
    steps_per_core = pl.cdiv(total_blocks, ncores)
    return block_rows, chunk_rows, total_blocks, steps_per_core


def _stats_kernel(p_ref, t_ref, o_ref, *, block_rows, chunk_rows, rows,
                  steps_per_core, need_mask):
    """Per-core accumulation of the six sufficient statistics.

    o_ref: (6, 8, 128) f32 slab for this core, resident across the
    "arbitrary" grid axis (its index_map depends only on the core index):
      o[0]=sum(p), o[1]=sum(t), o[2]=sum(p*t),
      o[3]=sum(p*p), o[4]=sum(t*t), o[5]=sum((p-t)^2)
    """
    c = pl.program_id(0)
    s = pl.program_id(1)

    @pl.when(s == 0)
    def _():
        o_ref[...] = jnp.zeros_like(o_ref)

    row0 = (c * steps_per_core + s) * block_rows
    n_chunks = block_rows // chunk_rows
    g = chunk_rows // _SUBLANES

    def block_stats(masked):
        def chunk_update(i, acc):
            sp, st, spt, spp, stt, sse = acc
            off = i * chunk_rows
            if not isinstance(off, int):
                off = pl.multiple_of(off, chunk_rows)
            p = p_ref[pl.ds(off, chunk_rows), :].astype(jnp.float32)
            t = t_ref[pl.ds(off, chunk_rows), :].astype(jnp.float32)
            if masked:
                rid = row0 + off + lax.broadcasted_iota(
                    jnp.int32, (chunk_rows, _LANES), 0)
                valid = rid < rows
                p = jnp.where(valid, p, 0.0)
                t = jnp.where(valid, t, 0.0)
            d = p - t

            def red(x):
                # Fold the chunk down to one (8, 128) vreg of partials (pure
                # VALU adds across sub-tiles; the reshape splits the leading
                # dim at sublane-tile granularity, so it is layout-free).
                if g == 1:
                    return x
                return x.reshape(g, _SUBLANES, _LANES).sum(axis=0)

            return (sp + red(p), st + red(t), spt + red(p * t),
                    spp + red(p * p), stt + red(t * t), sse + red(d * d))

        zero = jnp.zeros((_SUBLANES, _LANES), jnp.float32)
        init = (zero,) * 6
        if n_chunks == 1:
            return chunk_update(0, init)
        return lax.fori_loop(0, n_chunks, chunk_update, init, unroll=True)

    if need_mask:
        # Only tail / overflow steps pay for the row mask; interior
        # fully-valid blocks take the mask-free path at runtime.
        stats = lax.cond(row0 + block_rows <= rows,
                         lambda: block_stats(False),
                         lambda: block_stats(True))
    else:
        stats = block_stats(False)

    o_ref[0] += stats[0]
    o_ref[1] += stats[1]
    o_ref[2] += stats[2]
    o_ref[3] += stats[3]
    o_ref[4] += stats[4]
    o_ref[5] += stats[5]


def combined_loss(y_pred, y_true, alpha=0.5, eps=1e-8):
    """Pallas TPU implementation of CombinedLoss.forward (returns a scalar).

    Accepts f32 / bf16 / f16 inputs directly; statistics accumulate in f32.
    """
    assert y_pred.shape == y_true.shape
    n_elems = int(y_pred.size)
    ncores = _num_tensorcores()

    p = jnp.reshape(y_pred, (-1,))
    t = jnp.reshape(y_true, (-1,))

    lane_pad = (-n_elems) % _LANES
    if lane_pad:
        # TODO(synk): lane-ragged sizes pay one pad copy (extra HBM read+write
        # of both tensors); an in-kernel lane mask on the final partial row
        # would avoid it, but NCHW activations are essentially always
        # 128-aligned so this path is rarely taken.
        p = jnp.pad(p, (0, lane_pad))
        t = jnp.pad(t, (0, lane_pad))
    rows = (n_elems + lane_pad) // _LANES
    p = p.reshape(rows, _LANES)
    t = t.reshape(rows, _LANES)

    itemsize_p = max(jnp.dtype(p.dtype).itemsize, 1)
    itemsize_t = max(jnp.dtype(t.dtype).itemsize, 1)
    # Sublane granule for the narrowest dtype: (8,128) f32 / (16,128) bf16 /
    # (32,128) 8-bit minimum tiles.
    granule = max((4 // itemsize_p) * _SUBLANES,
                  (4 // itemsize_t) * _SUBLANES, _SUBLANES)

    block_rows, chunk_rows, total_blocks, steps_per_core = _choose_tiling(
        rows, ncores, granule)
    # Mask code is only generated when the (cores x steps x block_rows) grid
    # covers more rows than actually exist; even then only tail steps run it.
    need_mask = (ncores * steps_per_core * block_rows != rows)

    def in_index(c, s):
        # Clamp so padded grid steps re-read the last real block (their
        # contribution is zeroed by the in-kernel row mask).
        blk = jnp.minimum(c * steps_per_core + s, total_blocks - 1)
        return (blk, 0)

    kernel = functools.partial(
        _stats_kernel,
        block_rows=block_rows,
        chunk_rows=chunk_rows,
        rows=rows,
        steps_per_core=steps_per_core,
        need_mask=need_mask,
    )

    out_bytes = ncores * 6 * _SUBLANES * _LANES * 4
    cost = pl.CostEstimate(
        flops=12 * n_elems,
        transcendentals=0,
        bytes_accessed=int(p.size * itemsize_p + t.size * itemsize_t + out_bytes),
    )

    partials = pl.pallas_call(
        kernel,
        out_shape=jax.ShapeDtypeStruct((ncores, 6, _SUBLANES, _LANES),
                                       jnp.float32),
        grid_spec=pltpu.PrefetchScalarGridSpec(
            num_scalar_prefetch=0,
            grid=(ncores, steps_per_core),
            in_specs=[
                pl.BlockSpec((block_rows, _LANES), in_index),
                pl.BlockSpec((block_rows, _LANES), in_index),
            ],
            out_specs=pl.BlockSpec((None, 6, _SUBLANES, _LANES),
                                   lambda c, s: (c, 0, 0, 0)),
        ),
        compiler_params=pltpu.CompilerParams(
            # TODO(synk): on v7x, verify with xprof that the leading "parallel"
            # axis actually shards across the two TensorCores; switch to
            # pltpu.CORE_PARALLEL if it does not engage.
            dimension_semantics=("parallel", "arbitrary"),
            vmem_limit_bytes=_VMEM_LIMIT_BYTES,
        ),
        cost_estimate=cost,
    )(p, t)

    # Tiny finalize in plain JAX on the (ncores, 6, 8, 128) partial sums.
    stats = jnp.sum(partials, axis=(0, 2, 3))            # (6,)
    sp, st, spt, spp, stt, sse = (stats[i] for i in range(6))
    n = jnp.float32(n_elems)
    mse = sse / n                                        # fused (p-t)^2 sum
    cov = spt - sp * st / n
    # Clamp to guard against catastrophic cancellation making these negative.
    vxx = jnp.maximum(spp - sp * sp / n, 0.0)
    vyy = jnp.maximum(stt - st * st / n, 0.0)
    corr = cov / (jnp.sqrt(vxx) * jnp.sqrt(vyy) + jnp.float32(eps))
    corr_loss = 1.0 - corr
    return jnp.float32(alpha) * mse + jnp.float32(1.0 - alpha) * corr_loss


def _reference_loss(y_pred, y_true, alpha=0.5, eps=1e-8):
    """Pure-JAX reference matching the PyTorch module."""
    p = jnp.reshape(y_pred, (-1,)).astype(jnp.float32)
    t = jnp.reshape(y_true, (-1,)).astype(jnp.float32)
    mse = jnp.mean((p - t) ** 2)
    vx = p - jnp.mean(p)
    vy = t - jnp.mean(t)
    corr = jnp.sum(vx * vy) / (
        jnp.sqrt(jnp.sum(vx**2)) * jnp.sqrt(jnp.sum(vy**2)) + eps
    )
    return alpha * mse + (1.0 - alpha) * (1.0 - corr)


if __name__ == "__main__":
    key = jax.random.PRNGKey(0)
    k1, k2 = jax.random.split(key)
    # Small NCHW-shaped example inputs (the loss itself is shape-agnostic).
    y_pred = jax.random.normal(k1, (2, 4, 16, 16), dtype=jnp.float32)
    y_true = jax.random.normal(k2, (2, 4, 16, 16), dtype=jnp.float32)

    loss = jax.block_until_ready(combined_loss(y_pred, y_true, alpha=0.5))
    ref = jax.block_until_ready(_reference_loss(y_pred, y_true, alpha=0.5))

    assert jnp.isfinite(loss), "non-finite loss"
    assert abs(float(loss) - float(ref)) < 1e-4, (float(loss), float(ref))
    print("KERNEL_OK")
</pallas_src>

<mosaic_0001>
module attributes {stable_mosaic.version = 11 : i64} {
  func.func @_stats_kernel(%arg0: i32, %arg1: i32, %arg2: memref<16x128xf32, #tpu.memory_space<vmem>>, %arg3: memref<16x128xf32, #tpu.memory_space<vmem>>, %arg4: memref<1x6x8x128xf32, #tpu.memory_space<vmem>>) attributes {dimension_semantics = [#tpu.dimension_semantics<parallel>, #tpu.dimension_semantics<arbitrary>], iteration_bounds = array<i64: 1, 1>, scalar_prefetch = 0 : i64, scratch_operands = 0 : i64, tpu.core_type = #tpu.core_type<tc>, window_params = [{transform_indices = @transform_0, window_bounds = array<i64: 16, 128>}, {transform_indices = @transform_1, window_bounds = array<i64: 16, 128>}, {transform_indices = @transform_2, window_bounds = array<i64: 1, 6, 8, 128>}]} {
    %c0_i32 = arith.constant 0 : i32
    %0 = arith.cmpi eq, %arg1, %c0_i32 : i32
    %1 = arith.extui %0 : i1 to i32
    %c0_i32_0 = arith.constant 0 : i32
    %2 = arith.cmpi ne, %1, %c0_i32_0 : i32
    scf.if %2 {
      %cst_53 = arith.constant 0.000000e+00 : f32
      %65 = vector.broadcast %cst_53 : f32 to vector<6x8x128xf32>
      %c0_54 = arith.constant 0 : index
      %c0_55 = arith.constant 0 : index
      %c0_56 = arith.constant 0 : index
      %c0_57 = arith.constant 0 : index
      %66 = vector.load %arg4[%c0_54, %c0_55, %c0_56, %c0_57] : memref<1x6x8x128xf32, #tpu.memory_space<vmem>>, vector<1x6x8x128xf32>
      %67 = vector.shape_cast %66 : vector<1x6x8x128xf32> to vector<6x8x128xf32>
      %68 = vector.shape_cast %65 : vector<6x8x128xf32> to vector<1x6x8x128xf32>
      tpu.vector_store %arg4[%c0_54, %c0_55, %c0_56, %c0_57], %68 {strides = array<i32>} : memref<1x6x8x128xf32, #tpu.memory_space<vmem>>, vector<1x6x8x128xf32>,
    } else {
    }
    %cst = arith.constant 0.000000e+00 : f32
    %3 = vector.broadcast %cst : f32 to vector<8x128xf32>
    %c0 = arith.constant 0 : index
    %c0_1 = arith.constant 0 : index
    %4 = vector.load %arg2[%c0, %c0_1] : memref<16x128xf32, #tpu.memory_space<vmem>>, vector<16x128xf32>
    %c0_2 = arith.constant 0 : index
    %c0_3 = arith.constant 0 : index
    %5 = vector.load %arg3[%c0_2, %c0_3] : memref<16x128xf32, #tpu.memory_space<vmem>>, vector<16x128xf32>
    %6 = arith.subf %4, %5 : vector<16x128xf32>
    %7 = vector.shape_cast %4 : vector<16x128xf32> to vector<2x8x128xf32>
    %cst_4 = arith.constant dense<0.000000e+00> : vector<8x128xf32>
    %8 = vector.multi_reduction <add>, %7, %cst_4 [0] : vector<2x8x128xf32> to vector<8x128xf32>
    %9 = arith.addf %3, %8 : vector<8x128xf32>
    %10 = vector.shape_cast %5 : vector<16x128xf32> to vector<2x8x128xf32>
    %cst_5 = arith.constant dense<0.000000e+00> : vector<8x128xf32>
    %11 = vector.multi_reduction <add>, %10, %cst_5 [0] : vector<2x8x128xf32> to vector<8x128xf32>
    %12 = arith.addf %3, %11 : vector<8x128xf32>
    %13 = arith.mulf %4, %5 : vector<16x128xf32>
    %14 = vector.shape_cast %13 : vector<16x128xf32> to vector<2x8x128xf32>
    %cst_6 = arith.constant dense<0.000000e+00> : vector<8x128xf32>
    %15 = vector.multi_reduction <add>, %14, %cst_6 [0] : vector<2x8x128xf32> to vector<8x128xf32>
    %16 = arith.addf %3, %15 : vector<8x128xf32>
    %17 = arith.mulf %4, %4 : vector<16x128xf32>
    %18 = vector.shape_cast %17 : vector<16x128xf32> to vector<2x8x128xf32>
    %cst_7 = arith.constant dense<0.000000e+00> : vector<8x128xf32>
    %19 = vector.multi_reduction <add>, %18, %cst_7 [0] : vector<2x8x128xf32> to vector<8x128xf32>
    %20 = arith.addf %3, %19 : vector<8x128xf32>
    %21 = arith.mulf %5, %5 : vector<16x128xf32>
    %22 = vector.shape_cast %21 : vector<16x128xf32> to vector<2x8x128xf32>
    %cst_8 = arith.constant dense<0.000000e+00> : vector<8x128xf32>
    %23 = vector.multi_reduction <add>, %22, %cst_8 [0] : vector<2x8x128xf32> to vector<8x128xf32>
    %24 = arith.addf %3, %23 : vector<8x128xf32>
    %25 = arith.mulf %6, %6 : vector<16x128xf32>
    %26 = vector.shape_cast %25 : vector<16x128xf32> to vector<2x8x128xf32>
    %cst_9 = arith.constant dense<0.000000e+00> : vector<8x128xf32>
    %27 = vector.multi_reduction <add>, %26, %cst_9 [0] : vector<2x8x128xf32> to vector<8x128xf32>
    %28 = arith.addf %3, %27 : vector<8x128xf32>
    %c0_10 = arith.constant 0 : index
    %c0_11 = arith.constant 0 : index
    %c0_12 = arith.constant 0 : index
    %c0_13 = arith.constant 0 : index
    %29 = vector.load %arg4[%c0_10, %c0_11, %c0_12, %c0_13] : memref<1x6x8x128xf32, #tpu.memory_space<vmem>>, vector<1x1x8x128xf32>
    %30 = vector.shape_cast %29 : vector<1x1x8x128xf32> to vector<8x128xf32>
    %31 = arith.addf %30, %9 : vector<8x128xf32>
    %c0_14 = arith.constant 0 : index
    %c0_15 = arith.constant 0 : index
    %c0_16 = arith.constant 0 : index
    %c0_17 = arith.constant 0 : index
    %32 = vector.load %arg4[%c0_14, %c0_15, %c0_16, %c0_17] : memref<1x6x8x128xf32, #tpu.memory_space<vmem>>, vector<1x1x8x128xf32>
    %33 = vector.shape_cast %32 : vector<1x1x8x128xf32> to vector<8x128xf32>
    %34 = vector.shape_cast %31 : vector<8x128xf32> to vector<1x1x8x128xf32>
    tpu.vector_store %arg4[%c0_14, %c0_15, %c0_16, %c0_17], %34 {strides = array<i32>} : memref<1x6x8x128xf32, #tpu.memory_space<vmem>>, vector<1x1x8x128xf32>,
    %c0_18 = arith.constant 0 : index
    %c1 = arith.constant 1 : index
    %c0_19 = arith.constant 0 : index
    %c0_20 = arith.constant 0 : index
    %35 = vector.load %arg4[%c0_18, %c1, %c0_19, %c0_20] : memref<1x6x8x128xf32, #tpu.memory_space<vmem>>, vector<1x1x8x128xf32>
    %36 = vector.shape_cast %35 : vector<1x1x8x128xf32> to vector<8x128xf32>
    %37 = arith.addf %36, %12 : vector<8x128xf32>
    %c0_21 = arith.constant 0 : index
    %c1_22 = arith.constant 1 : index
    %c0_23 = arith.constant 0 : index
    %c0_24 = arith.constant 0 : index
    %38 = vector.load %arg4[%c0_21, %c1_22, %c0_23, %c0_24] : memref<1x6x8x128xf32, #tpu.memory_space<vmem>>, vector<1x1x8x128xf32>
    %39 = vector.shape_cast %38 : vector<1x1x8x128xf32> to vector<8x128xf32>
    %40 = vector.shape_cast %37 : vector<8x128xf32> to vector<1x1x8x128xf32>
    tpu.vector_store %arg4[%c0_21, %c1_22, %c0_23, %c0_24], %40 {strides = array<i32>} : memref<1x6x8x128xf32, #tpu.memory_space<vmem>>, vector<1x1x8x128xf32>,
    %c0_25 = arith.constant 0 : index
    %c2 = arith.constant 2 : index
    %c0_26 = arith.constant 0 : index
    %c0_27 = arith.constant 0 : index
    %41 = vector.load %arg4[%c0_25, %c2, %c0_26, %c0_27] : memref<1x6x8x128xf32, #tpu.memory_space<vmem>>, vector<1x1x8x128xf32>
    %42 = vector.shape_cast %41 : vector<1x1x8x128xf32> to vector<8x128xf32>
    %43 = arith.addf %42, %16 : vector<8x128xf32>
    %c0_28 = arith.constant 0 : index
    %c2_29 = arith.constant 2 : index
    %c0_30 = arith.constant 0 : index
    %c0_31 = arith.constant 0 : index
    %44 = vector.load %arg4[%c0_28, %c2_29, %c0_30, %c0_31] : memref<1x6x8x128xf32, #tpu.memory_space<vmem>>, vector<1x1x8x128xf32>
    %45 = vector.shape_cast %44 : vector<1x1x8x128xf32> to vector<8x128xf32>
    %46 = vector.shape_cast %43 : vector<8x128xf32> to vector<1x1x8x128xf32>
    tpu.vector_store %arg4[%c0_28, %c2_29, %c0_30, %c0_31], %46 {strides = array<i32>} : memref<1x6x8x128xf32, #tpu.memory_space<vmem>>, vector<1x1x8x128xf32>,
    %c0_32 = arith.constant 0 : index
    %c3 = arith.constant 3 : index
    %c0_33 = arith.constant 0 : index
    %c0_34 = arith.constant 0 : index
    %47 = vector.load %arg4[%c0_32, %c3, %c0_33, %c0_34] : memref<1x6x8x128xf32, #tpu.memory_space<vmem>>, vector<1x1x8x128xf32>
    %48 = vector.shape_cast %47 : vector<1x1x8x128xf32> to vector<8x128xf32>
    %49 = arith.addf %48, %20 : vector<8x128xf32>
    %c0_35 = arith.constant 0 : index
    %c3_36 = arith.constant 3 : index
    %c0_37 = arith.constant 0 : index
    %c0_38 = arith.constant 0 : index
    %50 = vector.load %arg4[%c0_35, %c3_36, %c0_37, %c0_38] : memref<1x6x8x128xf32, #tpu.memory_space<vmem>>, vector<1x1x8x128xf32>
    %51 = vector.shape_cast %50 : vector<1x1x8x128xf32> to vector<8x128xf32>
    %52 = vector.shape_cast %49 : vector<8x128xf32> to vector<1x1x8x128xf32>
    tpu.vector_store %arg4[%c0_35, %c3_36, %c0_37, %c0_38], %52 {strides = array<i32>} : memref<1x6x8x128xf32, #tpu.memory_space<vmem>>, vector<1x1x8x128xf32>,
    %c0_39 = arith.constant 0 : index
    %c4 = arith.constant 4 : index
    %c0_40 = arith.constant 0 : index
    %c0_41 = arith.constant 0 : index
    %53 = vector.load %arg4[%c0_39, %c4, %c0_40, %c0_41] : memref<1x6x8x128xf32, #tpu.memory_space<vmem>>, vector<1x1x8x128xf32>
    %54 = vector.shape_cast %53 : vector<1x1x8x128xf32> to vector<8x128xf32>
    %55 = arith.addf %54, %24 : vector<8x128xf32>
    %c0_42 = arith.constant 0 : index
    %c4_43 = arith.constant 4 : index
    %c0_44 = arith.constant 0 : index
    %c0_45 = arith.constant 0 : index
    %56 = vector.load %arg4[%c0_42, %c4_43, %c0_44, %c0_45] : memref<1x6x8x128xf32, #tpu.memory_space<vmem>>, vector<1x1x8x128xf32>
    %57 = vector.shape_cast %56 : vector<1x1x8x128xf32> to vector<8x128xf32>
    %58 = vector.shape_cast %55 : vector<8x128xf32> to vector<1x1x8x128xf32>
    tpu.vector_store %arg4[%c0_42, %c4_43, %c0_44, %c0_45], %58 {strides = array<i32>} : memref<1x6x8x128xf32, #tpu.memory_space<vmem>>, vector<1x1x8x128xf32>,
    %c0_46 = arith.constant 0 : index
    %c5 = arith.constant 5 : index
    %c0_47 = arith.constant 0 : index
    %c0_48 = arith.constant 0 : index
    %59 = vector.load %arg4[%c0_46, %c5, %c0_47, %c0_48] : memref<1x6x8x128xf32, #tpu.memory_space<vmem>>, vector<1x1x8x128xf32>
    %60 = vector.shape_cast %59 : vector<1x1x8x128xf32> to vector<8x128xf32>
    %61 = arith.addf %60, %28 : vector<8x128xf32>
    %c0_49 = arith.constant 0 : index
    %c5_50 = arith.constant 5 : index
    %c0_51 = arith.constant 0 : index
    %c0_52 = arith.constant 0 : index
    %62 = vector.load %arg4[%c0_49, %c5_50, %c0_51, %c0_52] : memref<1x6x8x128xf32, #tpu.memory_space<vmem>>, vector<1x1x8x128xf32>
    %63 = vector.shape_cast %62 : vector<1x1x8x128xf32> to vector<8x128xf32>
    %64 = vector.shape_cast %61 : vector<8x128xf32> to vector<1x1x8x128xf32>
    tpu.vector_store %arg4[%c0_49, %c5_50, %c0_51, %c0_52], %64 {strides = array<i32>} : memref<1x6x8x128xf32, #tpu.memory_space<vmem>>, vector<1x1x8x128xf32>,
    return
  }
  func.func @transform_0(%arg0: i32, %arg1: i32) -> (i32, i32) {
    %c1_i32 = arith.constant 1 : i32
    %0 = arith.muli %arg0, %c1_i32 : i32
    %1 = arith.addi %0, %arg1 : i32
    %c0_i32 = arith.constant 0 : i32
    %2 = arith.minsi %1, %c0_i32 : i32
    %c0_i32_0 = arith.constant 0 : i32
    %c0_i32_1 = arith.constant 0 : i32
    return %2, %c0_i32_0 : i32, i32
  }
  func.func @transform_1(%arg0: i32, %arg1: i32) -> (i32, i32) {
    %c1_i32 = arith.constant 1 : i32
    %0 = arith.muli %arg0, %c1_i32 : i32
    %1 = arith.addi %0, %arg1 : i32
    %c0_i32 = arith.constant 0 : i32
    %2 = arith.minsi %1, %c0_i32 : i32
    %c0_i32_0 = arith.constant 0 : i32
    %c0_i32_1 = arith.constant 0 : i32
    return %2, %c0_i32_0 : i32, i32
  }
  func.func @transform_2(%arg0: i32, %arg1: i32) -> (i32, i32, i32, i32) {
    %c0_i32 = arith.constant 0 : i32
    %c0_i32_0 = arith.constant 0 : i32
    %c0_i32_1 = arith.constant 0 : i32
    %c0_i32_2 = arith.constant 0 : i32
    return %arg0, %c0_i32, %c0_i32_0, %c0_i32_1 : i32, i32, i32, i32
  }
}

</mosaic_0001>

<llo_original>
// kernel: tpu_custom_call.1
$region0: #{tpu_custom_call.1}
  #allocation0 [shape = 'u32[]', space=smem, size = 0x4, offset = 0x4, fixed_abs, tag = 'smem constant byte address 0x4 - core index']
  #allocation1 [shape = 'u32[144,128]{1,0:T(1,128)}', space=vmem, size = 0x12000, scoped, tag = 'internal scratch']
  %s0 = inlined_call_operand.hbm [shape: f32[16,128], index: 0, kind: input, shape index: {}]
  %s1 = inlined_call_operand.hbm [shape: f32[16,128], index: 1, kind: input, shape index: {}]
  %s2 = inlined_call_operand.hbm [shape: f32[1,6,8,128], index: 2, kind: output, shape index: {}]
  %s3 = sld [smem:[#allocation0]]
  $region30: #{tpu_custom_call.1} parent=0
    _
  %s5 = ssub.s32 1, %s3
  %s6 = scalar_select 0, %s5, %s3
  $region1: #{tpu_custom_call.1} parent=0
    #allocation2 [shape = 'u8[8192]{0}', space=vmem, size = 0x2000, scoped, tag = 'input window, operand 0, single buffered']
    #allocation3 [shape = 's32[1]{0}', space=sflag, size = 0x4, scoped, tag = 'scoped memory for tpu_custom_call.1']
    #allocation4 [shape = 's32[1]{0}', space=sflag, size = 0x4, scoped, tag = 'scoped memory for tpu_custom_call.1']
    #allocation5 [shape = 'u8[8192]{0}', space=vmem, size = 0x2000, scoped, tag = 'input window, operand 1, single buffered']
    #allocation6 [shape = 's32[1]{0}', space=sflag, size = 0x4, scoped, tag = 'scoped memory for tpu_custom_call.1']
    #allocation7 [shape = 'u8[24576]{0}', space=vmem, size = 0x6000, scoped, tag = 'output window, operand 0, single buffered']
    %7 = vsyncpa [#allocation3], 0
    %8 = vsyncpa [#allocation6], 0
    %9 = vsyncpa [#allocation4], 0
    // Predicated region
    $region2: #{tpu_custom_call.1} parent=1 // pred_check
      _
    $region3: #{tpu_custom_call.1} parent=1 // pred_check_branch
      %11 = sbr.rel (0) target = $region5
    $region4: #{tpu_custom_call.1} parent=1 // pred_region
      %s12 = sadd.s32 0, 0
      %p13 = scmp.lt.s32.totalorder %s12, 0
      %s14 = scalar_select %p13, %s12, 0
      %s15 = smul.u32 2, %s14
      %s17 = ssub.s32 256, 256
      %18 = vsyncadd [#allocation3], %s17
      %s19 = smul.addr %s15, 128
      %s20 = scalar_lea.hbm %s0, %s19
      %s21 = sshll.u32 [#allocation2], 4
      %s22 = int_to_ptr.vmem [resolvable:$true] %s21
      %27 = dma.hbm_to_vmem [thread:$0]  %s20, 256, %s22, [#allocation3], 128, 128, 8
    $region5: #{tpu_custom_call.1} parent=1 // pred_fallthru
      _
    // Predicated region
    $region6: #{tpu_custom_call.1} parent=1 // pred_check
      _
    $region7: #{tpu_custom_call.1} parent=1 // pred_check_branch
      %29 = sbr.rel (0) target = $region9
    $region8: #{tpu_custom_call.1} parent=1 // pred_region
      %s30 = sadd.s32 0, 0
      %p31 = scmp.lt.s32.totalorder %s30, 0
      %s32 = scalar_select %p31, %s30, 0
      %s33 = smul.u32 2, %s32
      %s35 = ssub.s32 256, 256
      %36 = vsyncadd [#allocation6], %s35
      %s37 = smul.addr %s33, 128
      %s38 = scalar_lea.hbm %s1, %s37
      %s39 = sshll.u32 [#allocation5], 4
      %s40 = int_to_ptr.vmem [resolvable:$true] %s39
      %45 = dma.hbm_to_vmem [thread:$0]  %s38, 256, %s40, [#allocation6], 128, 128, 8
    $region9: #{tpu_custom_call.1} parent=1 // pred_fallthru
      _
    // Predicated region
    $region10: #{tpu_custom_call.1} parent=1 // pred_check
      _
    $region11: #{tpu_custom_call.1} parent=1 // pred_check_branch
      %47 = sbr.rel (0) target = $region13
    $region12: #{tpu_custom_call.1} parent=1 // pred_region
      %48 = dma.done [#allocation3], 256
    $region13: #{tpu_custom_call.1} parent=1 // pred_fallthru
      _
    // Predicated region
    $region14: #{tpu_custom_call.1} parent=1 // pred_check
      _
    $region15: #{tpu_custom_call.1} parent=1 // pred_check_branch
      %50 = sbr.rel (0) target = $region17
    $region16: #{tpu_custom_call.1} parent=1 // pred_region
      %51 = dma.done [#allocation6], 256
    $region17: #{tpu_custom_call.1} parent=1 // pred_fallthru
      _
    %s52 = sadd.s32 0, 0
    %p53 = scmp.lt.s32.totalorder %s52, 0
    %s54 = scalar_select %p53, %s52, 0
    %s55 = smul.u32 2, %s54
    %s56 = sadd.s32 0, 0
    %p57 = scmp.lt.s32.totalorder %s56, 0
    %s58 = scalar_select %p57, %s56, 0
    %s59 = smul.u32 2, %s58
    %p60 = scmp.eq.s32.totalorder 0, 0
    // Predicated region
    $region18: #{tpu_custom_call.1} parent=1 // pred_check
      %p61 = pneg %p60
    $region19: #{tpu_custom_call.1} parent=1 // pred_check_branch
      %63 = sbr.rel (%p61) target = $region21
    $region20: #{tpu_custom_call.1} parent=1 // pred_region
      %64 = vst [vmem:[#allocation7] sm:$0xff] 0.0
      %65 = vst [vmem:[#allocation7 + $0x8] sm:$0xff] 0.0
      %66 = vst [vmem:[#allocation7 + $0x10] sm:$0xff] 0.0
      %67 = vst [vmem:[#allocation7 + $0x18] sm:$0xff] 0.0
      %68 = vst [vmem:[#allocation7 + $0x20] sm:$0xff] 0.0
      %69 = vst [vmem:[#allocation7 + $0x28] sm:$0xff] 0.0
    $region21: #{tpu_custom_call.1} parent=1 // pred_fallthru
      _
    %v70 = vld [vmem:[#allocation2] sm:$0xff]
    %v71 = vld [vmem:[#allocation2 + $0x8] sm:$0xff]
    %v72 = vld [vmem:[#allocation5] sm:$0xff]
    %v73 = vld [vmem:[#allocation5 + $0x8] sm:$0xff]
    %v74 = vsub.f32 %v70, %v72
    %v75 = vsub.f32 %v71, %v73
    %v76 = vadd.f32 %v70, %v71
    %v77 = vadd.f32 %v76, 0.0
    %v78 = vadd.f32 %v72, %v73
    %v79 = vadd.f32 %v78, 0.0
    %v80 = vmul.f32 %v70, %v72
    %v81 = vmul.f32 %v71, %v73
    %v82 = vadd.f32 %v80, %v81
    %v83 = vadd.f32 %v82, 0.0
    %v84 = vmul.f32 %v70, %v70
    %v85 = vmul.f32 %v71, %v71
    %v86 = vadd.f32 %v84, %v85
    %v87 = vadd.f32 %v86, 0.0
    %v88 = vmul.f32 %v72, %v72
    %v89 = vmul.f32 %v73, %v73
    %v90 = vadd.f32 %v88, %v89
    %v91 = vadd.f32 %v90, 0.0
    %v92 = vmul.f32 %v74, %v74
    %v93 = vmul.f32 %v75, %v75
    %v94 = vadd.f32 %v92, %v93
    %v95 = vadd.f32 %v94, 0.0
    %v96 = vld [vmem:[#allocation7] sm:$0xff]
    %v97 = vadd.f32 %v96, %v77
    %98 = vst [vmem:[#allocation7] sm:$0xff] %v97
    %s99 = scalar_lea.vmem [#allocation7], 8
    %v100 = vld [vmem:[%s99] sm:$0xff]
    %v101 = vadd.f32 %v100, %v79
    %102 = vst [vmem:[%s99] sm:$0xff] %v101
    %s103 = scalar_lea.vmem [#allocation7], 16
    %v104 = vld [vmem:[%s103] sm:$0xff]
    %v105 = vadd.f32 %v104, %v83
    %106 = vst [vmem:[%s103] sm:$0xff] %v105
    %s107 = scalar_lea.vmem [#allocation7], 24
    %v108 = vld [vmem:[%s107] sm:$0xff]
    %v109 = vadd.f32 %v108, %v87
    %110 = vst [vmem:[%s107] sm:$0xff] %v109
    %s111 = scalar_lea.vmem [#allocation7], 32
    %v112 = vld [vmem:[%s111] sm:$0xff]
    %v113 = vadd.f32 %v112, %v91
    %114 = vst [vmem:[%s111] sm:$0xff] %v113
    %s115 = scalar_lea.vmem [#allocation7], 40
    %v116 = vld [vmem:[%s115] sm:$0xff]
    %v117 = vadd.f32 %v116, %v95
    %118 = vst [vmem:[%s115] sm:$0xff] %v117
    // Predicated region
    $region22: #{tpu_custom_call.1} parent=1 // pred_check
      _
    $region23: #{tpu_custom_call.1} parent=1 // pred_check_branch
      %120 = sbr.rel (0) target = $region25
    $region24: #{tpu_custom_call.1} parent=1 // pred_region
      %s122 = ssub.s32 768, 768
      %123 = vsyncadd [#allocation4], %s122
      %s124 = sshll.u32 [#allocation7], 4
      %s125 = int_to_ptr.vmem [resolvable:$true] %s124
      %130 = dma.vmem_to_hbm [thread:$0]  %s125, 768, %s2, [#allocation4], 128, 128, 8
    $region25: #{tpu_custom_call.1} parent=1 // pred_fallthru
      _
    // Predicated region
    $region26: #{tpu_custom_call.1} parent=1 // pred_check
      _
    $region27: #{tpu_custom_call.1} parent=1 // pred_check_branch
      %132 = sbr.rel (0) target = $region29
    $region28: #{tpu_custom_call.1} parent=1 // pred_region
      %133 = dma.done [#allocation4], 768
    $region29: #{tpu_custom_call.1} parent=1 // pred_fallthru
      _
    %134 = vsyncpa [#allocation3], 1
    %135 = vsyncpa [#allocation6], 1
    %136 = vsyncpa [#allocation4], 1

</llo_original>
